<compile_context>
chip_gen: v7x
topology: tpu7x:2x2x1
jax: 0.10.0
libtpu: 0.0.40
codegen_flags: <defaults>
</compile_context>

<pallas_src>
import math

import jax
import jax.numpy as jnp
from jax.experimental import pallas as pl
from jax.experimental.pallas import tpu as pltpu


def _round_up(n, m):
    return ((n + m - 1) // m) * m


def _cdiv(a, b):
    return -(-a // b)


def _sublane_multiple(dtype):
    # 8 for f32, 16 for bf16, 32 for int8/fp8 (packed dtypes pack along sublanes).
    return max(8, 32 // jnp.dtype(dtype).itemsize)


def _tpu_generation():
    try:
        kind = jax.devices()[0].device_kind.lower()
    except Exception:
        return "unknown"
    if "v5 lite" in kind or "v5e" in kind or "v5lite" in kind:
        return "v5e"
    if "v6" in kind or "trillium" in kind:
        return "v6e"
    if "v7" in kind:
        return "v7x"
    return "unknown"


def _vmem_capacity_bytes(gen):
    try:
        return int(pltpu.get_tpu_info().vmem_capacity_bytes)
    except Exception:
        pass
    # Conservative fallbacks: 128 MiB on v5e/v6e, 64 MiB on v7x / unknown.
    return {"v5e": 128 << 20, "v6e": 128 << 20, "v7x": 64 << 20}.get(gen, 64 << 20)


def _tile_f_candidates(d_ff, gran):
    """Divisors of d_ff that are multiples of the MXU granularity, descending.

    Candidates always divide d_ff exactly -- the reduction axis must never be
    a partial block (OOB garbage would contaminate the accumulation)."""
    if d_ff % gran != 0:
        gran = 128
    if d_ff % gran != 0:
        return [d_ff]
    cands = [tf for tf in range(d_ff, gran - 1, -gran) if d_ff % tf == 0]
    return cands or [d_ff]


def _select_tiles(T, d_model, d_ff, x_isz, w_isz, out_isz, with_acc,
                  gen, vmem_budget, sublane, tile_t_req=None, tile_f_req=None):
    """Pick (tile_t, tile_f, vmem_footprint_bytes) that fit the VMEM budget."""

    def footprint(tt, tf):
        fp = (2 * tt * d_model * x_isz          # x blocks (double-buffered)
              + 2 * d_model * tf * w_isz        # W1 slabs
              + 2 * tf * w_isz                  # b1 slabs
              + 2 * tf * d_model * w_isz        # W2 slabs
              + 2 * d_model * w_isz             # b2
              + 2 * tt * d_model * out_isz)     # out blocks
        if with_acc:
            fp += tt * d_model * 4              # f32 accumulator scratch
        return fp

    # Token tile past the HBM/MXU crossover per generation
    # (~240 / ~650 / ~310 FLOPs per weight byte on v5e / v6e / v7x).
    desired_t = {"v5e": 512, "v6e": 1024, "v7x": 512}.get(gen, 512)
    if tile_t_req is not None:
        desired_t = tile_t_req
    tile_t = min(_round_up(desired_t, sublane), _round_up(T, sublane))
    # v7x megacore: keep the "parallel" token axis >= 2 tiles so both
    # TensorCores get work.  No-op on 1-TC parts.
    if gen == "v7x" and tile_t_req is None and T > sublane and _cdiv(T, tile_t) < 2:
        tile_t = max(sublane, _round_up(_cdiv(T, 2), sublane))

    gran = 128 if gen == "v5e" else 256   # MXU: 4x128^2 (v5e) vs 2x256^2 (v6e/v7x)
    if tile_f_req is not None:
        cands = [tile_f_req]
    else:
        cands = _tile_f_candidates(d_ff, gran)  # cands[0] == d_ff -> resident weights

    while True:
        for tf in cands:
            if footprint(tile_t, tf) <= vmem_budget:
                return tile_t, tf, footprint(tile_t, tf)
        if tile_t <= sublane or tile_t_req is not None:
            tf = cands[-1]
            return tile_t, tf, footprint(tile_t, tf)
        tile_t = max(sublane, _round_up(tile_t // 2, sublane))


def _ffn_kernel(x_ref, w1_ref, b1_ref, w2_ref, b2_ref, o_ref, *scratch):
    # x_ref:   (tile_t, d_model)   VMEM
    # w1_ref:  (d_model, tile_f)   VMEM   (f-th column slab of W1)
    # b1_ref:  (1, tile_f)         VMEM
    # w2_ref:  (tile_f, d_model)   VMEM   (f-th row slab of W2)
    # b2_ref:  (1, d_model)        VMEM
    # o_ref:   (tile_t, d_model)   VMEM   (resident across the f axis)
    # scratch: (acc_ref,) only when the output dtype is not f32; otherwise the
    #          f32 output block itself is the accumulator (saves VMEM + a copy).
    acc_ref = scratch[0] if scratch else o_ref
    f = pl.program_id(1)

    @pl.when(f == 0)
    def _():
        acc_ref[...] = jnp.zeros_like(acc_ref)

    # linear_1 slab: x @ W1[:, slab] + b1[slab], f32 accumulation on the MXU.
    h = jnp.dot(x_ref[...], w1_ref[...], preferred_element_type=jnp.float32)
    # ReLU acts per d_ff column, so applying it per slab is exact.
    h = jnp.maximum(h + b1_ref[...].astype(jnp.float32), 0.0)
    # dropout (eval mode) == identity.
    # TODO(synk): training-mode dropout would need pltpu.prng_seed/prng_random_bits.

    # linear_2 partial product.  h is downcast to the weight dtype (bf16 fast
    # path) before the MXU; accumulation stays f32.
    acc_ref[...] += jnp.dot(h.astype(w2_ref.dtype), w2_ref[...],
                            preferred_element_type=jnp.float32)

    @pl.when(f == pl.num_programs(1) - 1)
    def _():
        if scratch:
            o_ref[...] = (acc_ref[...] + b2_ref[...].astype(jnp.float32)
                          ).astype(o_ref.dtype)
        else:
            o_ref[...] += b2_ref[...].astype(o_ref.dtype)


def feed_forward(x, w1, b1, w2, b2, *, tile_t=None, tile_f=None, mxu_dtype=None):
    """FeedForward forward pass (eval-mode dropout == identity).

    x:  [batch, seq, d_model]
    w1: [d_model, d_ff], b1: [d_ff], w2: [d_ff, d_model], b2: [d_model]
    tile_t / tile_f: optional overrides of the auto-selected tiles.
    mxu_dtype: optionally cast activations & weights (e.g. jnp.bfloat16) for the
      MXU fast path; f32 accumulation, output keeps the original x dtype.
    """
    batch, seq, d_model = x.shape
    d_ff = w1.shape[1]
    T = batch * seq
    out_dtype = x.dtype

    if mxu_dtype is not None:
        x = x.astype(mxu_dtype)
        w1 = w1.astype(mxu_dtype)
        b1 = b1.astype(mxu_dtype)
        w2 = w2.astype(mxu_dtype)
        b2 = b2.astype(mxu_dtype)

    x2d = x.reshape(T, d_model)
    b1_2d = b1.reshape(1, d_ff)
    b2_2d = b2.reshape(1, d_model)

    gen = _tpu_generation()
    vmem_cap = _vmem_capacity_bytes(gen)
    # Mosaic headroom: ~12 MiB on 64 MiB parts, ~16 MiB on 128 MiB parts.
    vmem_budget = vmem_cap - max(12 << 20, vmem_cap // 8)

    x_isz = jnp.dtype(x.dtype).itemsize
    w_isz = jnp.dtype(w1.dtype).itemsize
    out_isz = jnp.dtype(out_dtype).itemsize
    acc_in_out = jnp.dtype(out_dtype) == jnp.float32
    sublane = _sublane_multiple(x.dtype)

    tile_t_eff, tile_f_eff, fp = _select_tiles(
        T, d_model, d_ff, x_isz, w_isz, out_isz, not acc_in_out,
        gen, vmem_budget, sublane, tile_t_req=tile_t, tile_f_req=tile_f)
    assert d_ff % tile_f_eff == 0, "reduction tile must divide d_ff exactly"

    n_t = _cdiv(T, tile_t_eff)
    n_f = d_ff // tile_f_eff
    grid = (n_t, n_f)

    # Never clamp the compiler's VMEM limit below the actual tile footprint.
    vmem_limit = max(fp + (8 << 20), 32 << 20)
    vmem_limit = min(vmem_limit, max(vmem_cap, fp + (4 << 20)))

    # Truthful bytes-accessed estimate: weights are re-streamed once per token
    # tile unless fully resident (tile_f == d_ff).
    weight_passes = 1 if tile_f_eff >= d_ff else n_t
    cost = pl.CostEstimate(
        flops=4 * T * d_model * d_ff,
        transcendentals=0,
        bytes_accessed=int(
            T * d_model * (x_isz + out_isz)
            + weight_passes * (w1.size + w2.size + b1.size) * w_isz
            + b2.size * w_isz),
    )

    scratch_shapes = ([] if acc_in_out
                      else [pltpu.VMEM((tile_t_eff, d_model), jnp.float32)])

    out2d = pl.pallas_call(
        _ffn_kernel,
        out_shape=jax.ShapeDtypeStruct((T, d_model), out_dtype),
        grid_spec=pltpu.PrefetchScalarGridSpec(
            num_scalar_prefetch=0,
            grid=grid,
            in_specs=[
                pl.BlockSpec((tile_t_eff, d_model), lambda i, f: (i, 0)),  # x tile
                pl.BlockSpec((d_model, tile_f_eff), lambda i, f: (0, f)),  # W1 slab
                pl.BlockSpec((1, tile_f_eff),       lambda i, f: (0, f)),  # b1 slab
                pl.BlockSpec((tile_f_eff, d_model), lambda i, f: (f, 0)),  # W2 slab
                pl.BlockSpec((1, d_model),          lambda i, f: (0, 0)),  # b2
            ],
            out_specs=pl.BlockSpec((tile_t_eff, d_model), lambda i, f: (i, 0)),
            scratch_shapes=scratch_shapes,
        ),
        compiler_params=pltpu.CompilerParams(
            dimension_semantics=("parallel", "arbitrary"),
            vmem_limit_bytes=int(vmem_limit),
        ),
        cost_estimate=cost,
    )(x2d, w1, b1_2d, w2, b2_2d)

    return out2d.reshape(batch, seq, d_model)


def init_params(key, d_model, d_ff, dtype=jnp.float32):
    """Deterministic init mimicking nn.Linear defaults (kaiming-uniform-ish)."""
    k1, k2, k3, k4 = jax.random.split(key, 4)
    bound1 = 1.0 / math.sqrt(d_model)
    bound2 = 1.0 / math.sqrt(d_ff)
    # Stored as [in, out] (transposed vs. PyTorch's [out, in]).
    w1 = jax.random.uniform(k1, (d_model, d_ff), dtype, -bound1, bound1)
    b1 = jax.random.uniform(k2, (d_ff,), dtype, -bound1, bound1)
    w2 = jax.random.uniform(k3, (d_ff, d_model), dtype, -bound2, bound2)
    b2 = jax.random.uniform(k4, (d_model,), dtype, -bound2, bound2)
    return w1, b1, w2, b2


def _reference_f32(x, w1, b1, w2, b2):
    return jnp.maximum(x @ w1 + b1, 0.0) @ w2 + b2


def _reference_mxu(x, w1, b1, w2, b2, mxu_dtype):
    """Emulates the kernel's low-precision MXU path (f32 accumulation)."""
    xc, w1c, b1c, w2c, b2c = (a.astype(mxu_dtype) for a in (x, w1, b1, w2, b2))
    h = jnp.dot(xc, w1c, preferred_element_type=jnp.float32)
    h = jnp.maximum(h + b1c.astype(jnp.float32), 0.0).astype(mxu_dtype)
    return jnp.dot(h, w2c, preferred_element_type=jnp.float32) + b2c.astype(jnp.float32)


if __name__ == "__main__":
    key = jax.random.PRNGKey(0)
    kx1, kp1, kx2, kp2, kx3, kp3, kx4, kp4 = jax.random.split(key, 8)

    # Case 1 (f32): forced small tiles -> 2 token tiles (last one partial, T=24)
    # and 2 reduction steps accumulating directly into the f32 output block.
    batch, seq, d_model, d_ff = 3, 8, 128, 256
    x = jax.random.normal(kx1, (batch, seq, d_model), jnp.float32)
    w1, b1, w2, b2 = init_params(kp1, d_model, d_ff)
    out = jax.block_until_ready(feed_forward(x, w1, b1, w2, b2, tile_t=16, tile_f=128))
    ref = _reference_f32(x, w1, b1, w2, b2)
    assert out.shape == (batch, seq, d_model)
    assert jnp.allclose(out, ref, atol=1e-4, rtol=1e-4)

    # Case 2 (f32): tiny shapes, auto tiles -> single grid step, resident weights.
    batch, seq, d_model, d_ff = 2, 8, 32, 64
    x = jax.random.normal(kx2, (batch, seq, d_model), jnp.float32)
    w1, b1, w2, b2 = init_params(kp2, d_model, d_ff)
    out = jax.block_until_ready(feed_forward(x, w1, b1, w2, b2))
    ref = _reference_f32(x, w1, b1, w2, b2)
    assert out.shape == (batch, seq, d_model)
    assert jnp.allclose(out, ref, atol=1e-4, rtol=1e-4)

    # Case 3 (f32 in/out, bf16 MXU fast path): compared against a bf16-emulated
    # reference with f32 accumulation.
    batch, seq, d_model, d_ff = 2, 16, 128, 256
    x = jax.random.normal(kx3, (batch, seq, d_model), jnp.float32)
    w1, b1, w2, b2 = init_params(kp3, d_model, d_ff)
    out = jax.block_until_ready(
        feed_forward(x, w1, b1, w2, b2, mxu_dtype=jnp.bfloat16))
    ref = _reference_mxu(x, w1, b1, w2, b2, jnp.bfloat16)
    assert out.shape == (batch, seq, d_model)
    assert jnp.allclose(out, ref, atol=1e-2, rtol=1e-2)

    # Case 4 (bf16 end-to-end): exercises the f32 scratch-accumulator path
    # (non-f32 output) with a multi-step reduction.
    batch, seq, d_model, d_ff = 2, 16, 128, 256
    x = jax.random.normal(kx4, (batch, seq, d_model), jnp.float32).astype(jnp.bfloat16)
    w1, b1, w2, b2 = init_params(kp4, d_model, d_ff, dtype=jnp.bfloat16)
    out = jax.block_until_ready(feed_forward(x, w1, b1, w2, b2, tile_f=128))
    ref = _reference_mxu(x, w1, b1, w2, b2, jnp.bfloat16).astype(jnp.bfloat16)
    assert out.shape == (batch, seq, d_model)
    assert jnp.allclose(out.astype(jnp.float32), ref.astype(jnp.float32),
                        atol=2e-2, rtol=2e-2)

    print("KERNEL_OK")
</pallas_src>

<mosaic_0001>
module attributes {stable_mosaic.version = 11 : i64} {
  func.func @_ffn_kernel(%arg0: i32, %arg1: i32, %arg2: memref<16x128xf32, #tpu.memory_space<vmem>>, %arg3: memref<128x128xf32, #tpu.memory_space<vmem>>, %arg4: memref<1x128xf32, #tpu.memory_space<vmem>>, %arg5: memref<128x128xf32, #tpu.memory_space<vmem>>, %arg6: memref<1x128xf32, #tpu.memory_space<vmem>>, %arg7: memref<16x128xf32, #tpu.memory_space<vmem>>) attributes {dimension_semantics = [#tpu.dimension_semantics<parallel>, #tpu.dimension_semantics<arbitrary>], iteration_bounds = array<i64: 2, 2>, scalar_prefetch = 0 : i64, scratch_operands = 0 : i64, tpu.core_type = #tpu.core_type<tc>, window_params = [{transform_indices = @transform_0, window_bounds = array<i64: 16, 128>}, {transform_indices = @transform_1, window_bounds = array<i64: 128, 128>}, {transform_indices = @transform_2, window_bounds = array<i64: 1, 128>}, {transform_indices = @transform_3, window_bounds = array<i64: 128, 128>}, {pipeline_mode = #tpu.pipeline_mode<synchronous>, transform_indices = @transform_4, window_bounds = array<i64: 1, 128>}, {transform_indices = @transform_5, window_bounds = array<i64: 16, 128>}]} {
    %c0_i32 = arith.constant 0 : i32
    %0 = arith.cmpi eq, %arg1, %c0_i32 : i32
    %1 = arith.extui %0 : i1 to i32
    %c0_i32_0 = arith.constant 0 : i32
    %2 = arith.cmpi ne, %1, %c0_i32_0 : i32
    scf.if %2 {
      %cst_15 = arith.constant 0.000000e+00 : f32
      %19 = vector.broadcast %cst_15 : f32 to vector<16x128xf32>
      %c0_16 = arith.constant 0 : index
      %c0_17 = arith.constant 0 : index
      %20 = vector.load %arg7[%c0_16, %c0_17] : memref<16x128xf32, #tpu.memory_space<vmem>>, vector<16x128xf32>
      tpu.vector_store %arg7[%c0_16, %c0_17], %19 {strides = array<i32>} : memref<16x128xf32, #tpu.memory_space<vmem>>, vector<16x128xf32>,
    } else {
    }
    %c0 = arith.constant 0 : index
    %c0_1 = arith.constant 0 : index
    %3 = vector.load %arg2[%c0, %c0_1] : memref<16x128xf32, #tpu.memory_space<vmem>>, vector<16x128xf32>
    %c0_2 = arith.constant 0 : index
    %c0_3 = arith.constant 0 : index
    %4 = vector.load %arg3[%c0_2, %c0_3] : memref<128x128xf32, #tpu.memory_space<vmem>>, vector<128x128xf32>
    %cst = arith.constant dense<0.000000e+00> : vector<16x128xf32>
    %5 = tpu.matmul %3, %4, %cst {dimension_numbers = #tpu.dot_dimension_numbers<[1], [0], [0], [1], [0, 0, 1, 1], [], []>} : vector<16x128xf32>, vector<128x128xf32>, vector<16x128xf32> -> vector<16x128xf32>
    %c0_4 = arith.constant 0 : index
    %c0_5 = arith.constant 0 : index
    %6 = vector.load %arg4[%c0_4, %c0_5] : memref<1x128xf32, #tpu.memory_space<vmem>>, vector<1x128xf32>
    %7 = vector.broadcast %6 : vector<1x128xf32> to vector<16x128xf32>
    %8 = arith.addf %5, %7 : vector<16x128xf32>
    %cst_6 = arith.constant 0.000000e+00 : f32
    %9 = vector.broadcast %cst_6 : f32 to vector<16x128xf32>
    %10 = arith.maximumf %8, %9 : vector<16x128xf32>
    %c0_7 = arith.constant 0 : index
    %c0_8 = arith.constant 0 : index
    %11 = vector.load %arg7[%c0_7, %c0_8] : memref<16x128xf32, #tpu.memory_space<vmem>>, vector<16x128xf32>
    %c0_9 = arith.constant 0 : index
    %c0_10 = arith.constant 0 : index
    %12 = vector.load %arg5[%c0_9, %c0_10] : memref<128x128xf32, #tpu.memory_space<vmem>>, vector<128x128xf32>
    %cst_11 = arith.constant dense<0.000000e+00> : vector<16x128xf32>
    %13 = tpu.matmul %10, %12, %cst_11 {dimension_numbers = #tpu.dot_dimension_numbers<[1], [0], [0], [1], [0, 0, 1, 1], [], []>} : vector<16x128xf32>, vector<128x128xf32>, vector<16x128xf32> -> vector<16x128xf32>
    %14 = arith.addf %11, %13 : vector<16x128xf32>
    %c0_12 = arith.constant 0 : index
    %c0_13 = arith.constant 0 : index
    %15 = vector.load %arg7[%c0_12, %c0_13] : memref<16x128xf32, #tpu.memory_space<vmem>>, vector<16x128xf32>
    tpu.vector_store %arg7[%c0_12, %c0_13], %14 {strides = array<i32>} : memref<16x128xf32, #tpu.memory_space<vmem>>, vector<16x128xf32>,
    %c1_i32 = arith.constant 1 : i32
    %16 = arith.cmpi eq, %arg1, %c1_i32 : i32
    %17 = arith.extui %16 : i1 to i32
    %c0_i32_14 = arith.constant 0 : i32
    %18 = arith.cmpi ne, %17, %c0_i32_14 : i32
    scf.if %18 {
      %c0_15 = arith.constant 0 : index
      %c0_16 = arith.constant 0 : index
      %19 = vector.load %arg7[%c0_15, %c0_16] : memref<16x128xf32, #tpu.memory_space<vmem>>, vector<16x128xf32>
      %c0_17 = arith.constant 0 : index
      %c0_18 = arith.constant 0 : index
      %20 = vector.load %arg6[%c0_17, %c0_18] : memref<1x128xf32, #tpu.memory_space<vmem>>, vector<1x128xf32>
      %21 = vector.broadcast %20 : vector<1x128xf32> to vector<16x128xf32>
      %22 = arith.addf %19, %21 : vector<16x128xf32>
      %c0_19 = arith.constant 0 : index
      %c0_20 = arith.constant 0 : index
      %23 = vector.load %arg7[%c0_19, %c0_20] : memref<16x128xf32, #tpu.memory_space<vmem>>, vector<16x128xf32>
      tpu.vector_store %arg7[%c0_19, %c0_20], %22 {strides = array<i32>} : memref<16x128xf32, #tpu.memory_space<vmem>>, vector<16x128xf32>,
    } else {
    }
    return
  }
  func.func @transform_0(%arg0: i32, %arg1: i32) -> (i32, i32) {
    %c0_i32 = arith.constant 0 : i32
    %c0_i32_0 = arith.constant 0 : i32
    return %arg0, %c0_i32 : i32, i32
  }
  func.func @transform_1(%arg0: i32, %arg1: i32) -> (i32, i32) {
    %c0_i32 = arith.constant 0 : i32
    %c0_i32_0 = arith.constant 0 : i32
    return %c0_i32, %arg1 : i32, i32
  }
  func.func @transform_2(%arg0: i32, %arg1: i32) -> (i32, i32) {
    %c0_i32 = arith.constant 0 : i32
    %c0_i32_0 = arith.constant 0 : i32
    return %c0_i32, %arg1 : i32, i32
  }
  func.func @transform_3(%arg0: i32, %arg1: i32) -> (i32, i32) {
    %c0_i32 = arith.constant 0 : i32
    %c0_i32_0 = arith.constant 0 : i32
    return %arg1, %c0_i32 : i32, i32
  }
  func.func @transform_4(%arg0: i32, %arg1: i32) -> (i32, i32) {
    %c0_i32 = arith.constant 0 : i32
    %c0_i32_0 = arith.constant 0 : i32
    %c0_i32_1 = arith.constant 0 : i32
    return %c0_i32, %c0_i32_0 : i32, i32
  }
  func.func @transform_5(%arg0: i32, %arg1: i32) -> (i32, i32) {
    %c0_i32 = arith.constant 0 : i32
    %c0_i32_0 = arith.constant 0 : i32
    return %arg0, %c0_i32 : i32, i32
  }
}

</mosaic_0001>

<llo_original>
// kernel: tpu_custom_call.1
$region0: #{tpu_custom_call.1}
  #allocation0 [shape = 'u32[]', space=smem, size = 0x4, offset = 0x4, fixed_abs, tag = 'smem constant byte address 0x4 - core index']
  #allocation1 [shape = 'u32[144,128]{1,0:T(1,128)}', space=vmem, size = 0x12000, scoped, tag = 'internal scratch']
  %s0 = inlined_call_operand.hbm [shape: f32[24,128], index: 0, kind: input, shape index: {}]
  %s1 = inlined_call_operand.hbm [shape: f32[128,256], index: 1, kind: input, shape index: {}]
  %s2 = inlined_call_operand.vmem [shape: f32[1,256], index: 2, kind: input, shape index: {}]
  %s3 = inlined_call_operand.hbm [shape: f32[256,128], index: 3, kind: input, shape index: {}]
  %s4 = inlined_call_operand.vmem [shape: f32[1,128], index: 4, kind: input, shape index: {}]
  %s5 = inlined_call_operand.hbm [shape: f32[24,128], index: 5, kind: output, shape index: {}]
  %s6 = sld [smem:[#allocation0]]
  $region73: #{tpu_custom_call.1} parent=0
    _
  %s8 = ssub.s32 1, %s6
  %s9 = scalar_select 0, %s8, %s6
  $region1: #{tpu_custom_call.1} parent=0
    #allocation2 [shape = 'u8[16384]{0}', space=vmem, size = 0x4000, scoped, tag = 'input window, operand 0']
    #allocation3 [shape = 's32[2]{0}', space=sflag, size = 0x8, scoped, tag = 'scoped memory for tpu_custom_call.1']
    #allocation4 [shape = 's32[2]{0}', space=sflag, size = 0x8, scoped, tag = 'scoped memory for tpu_custom_call.1']
    #allocation5 [shape = 'u8[131072]{0}', space=vmem, size = 0x20000, scoped, tag = 'input window, operand 1']
    #allocation6 [shape = 's32[2]{0}', space=sflag, size = 0x8, scoped, tag = 'scoped memory for tpu_custom_call.1']
    #allocation7 [shape = 'u8[131072]{0}', space=vmem, size = 0x20000, scoped, tag = 'input window, operand 3']
    #allocation8 [shape = 'u8[16384]{0}', space=vmem, size = 0x4000, scoped, tag = 'output window, operand 0']
    %10 = vsyncpa [#allocation3], 0
    %s11 = scalar_lea.sflag [#allocation3], 1
    %12 = vsyncpa %s11, 0
    %13 = vsyncpa [#allocation6], 0
    %s14 = scalar_lea.sflag [#allocation6], 1
    %15 = vsyncpa %s14, 0
    %16 = vsyncpa [#allocation4], 0
    %s17 = scalar_lea.sflag [#allocation4], 1
    %18 = vsyncpa %s17, 0
    loop: start=0, step=1, limit=6
    $region2: #{tpu_custom_call.1} parent=1 // loop_pre_header
      _
    $region3: #{tpu_custom_call.1} parent=1 // loop_header
      %s20 = sphi 0, %s24
      %p21 = scmp.ge.s32.totalorder %s20, 6
      %s27 = sphi 0, %s39
      %s28 = sphi 0, %s35
      %s29 = sphi 0, %s27
      %s30 = sphi 0, %s28
      %s31 = sphi 0, %s29
      %s32 = sphi 0, %s30
      %s42 = sphi 0, %s44
      %s45 = sphi 0, %s42
      %s46 = sphi 0, %s45
      %s62 = sphi 0, %s46
      %s68 = sphi 0, %s70
      %s71 = sphi 0, %s68
      %s72 = sphi 0, %s71
      %s88 = sphi 0, %s72
      %s94 = sphi 0, %s96
      %s97 = sphi 0, %s94
      %s98 = sphi 0, %s97
      %s114 = sphi 0, %s98
      %s120 = sphi 0, %s122
      %s123 = sphi 0, %s120
      %s124 = sphi 0, %s123
      %s140 = sphi 0, %s124
      %s144 = sphi 0, %s144
      %s146 = sphi 0, %s144
      %s147 = sphi 0, %s146
      %s161 = sphi 0, %s147
      %s167 = sphi 0, %s169
      %s170 = sphi 0, %s167
      %s171 = sphi 0, %s170
      %s187 = sphi 0, %s171
    $region4: #{tpu_custom_call.1} parent=1 // loop_header_branch
      %23 = sbr.rel (%p21) target = $region8
    $region5: #{tpu_custom_call.1} parent=1 // loop_body
      %s25 = ssub.s32 %s20, 1
      %s26 = ssub.s32 %s20, 2
      %s33 = sadd.s32 1, %s28
      %p34 = scmp.ge.s32.totalorder %s33, 2
      %s35 = scalar_select %p34, 0, %s33
      %s36 = sadd.s32 1, %s27
      %s37 = scalar_select %p34, %s36, %s27
      %p38 = scmp.ge.s32.totalorder %s37, 2
      %s39 = scalar_select %p38, 0, %s37
      %s40 = ssub.s32 %s27, %s39
      %p41 = scmp.eq.s32.totalorder %s40, 0
      %s43 = sadd.s32 %s42, 1
      %s44 = scalar_select %p41, %s42, %s43
      %p47 = pneg %p41
      %p48 = scmp.eq.s32.totalorder %s20, 3
      %p49 = por %p47, %p48
      %p50 = scmp.ne.s32.totalorder %s42, %s45
      %p51 = scmp.eq.s32.totalorder %s20, 0
      %p52 = por %p50, %p51
      %p53 = scmp.ne.s32.totalorder %s42, %s45
      %p54 = scmp.eq.s32.totalorder %s25, 3
      %p55 = por %p53, %p54
      %p56 = scmp.ne.s32.totalorder %s45, %s46
      %p57 = scmp.eq.s32.totalorder %s25, 0
      %p58 = por %p56, %p57
      %p59 = scmp.ne.s32.totalorder %s45, %s46
      %p60 = scmp.eq.s32.totalorder %s26, 3
      %p61 = por %p59, %p60
      %p63 = scmp.ne.s32.totalorder %s46, %s62
      %p64 = scmp.eq.s32.totalorder %s26, 0
      %p65 = por %p63, %p64
      %s66 = ssub.s32 %s28, %s35
      %p67 = scmp.eq.s32.totalorder %s66, 0
      %s69 = sadd.s32 %s68, 1
      %s70 = scalar_select %p67, %s68, %s69
      %p73 = pneg %p67
      %p74 = scmp.eq.s32.totalorder %s20, 3
      %p75 = por %p73, %p74
      %p76 = scmp.ne.s32.totalorder %s68, %s71
      %p77 = scmp.eq.s32.totalorder %s20, 0
      %p78 = por %p76, %p77
      %p79 = scmp.ne.s32.totalorder %s68, %s71
      %p80 = scmp.eq.s32.totalorder %s25, 3
      %p81 = por %p79, %p80
      %p82 = scmp.ne.s32.totalorder %s71, %s72
      %p83 = scmp.eq.s32.totalorder %s25, 0
      %p84 = por %p82, %p83
      %p85 = scmp.ne.s32.totalorder %s71, %s72
      %p86 = scmp.eq.s32.totalorder %s26, 3
      %p87 = por %p85, %p86
      %p89 = scmp.ne.s32.totalorder %s72, %s88
      %p90 = scmp.eq.s32.totalorder %s26, 0
      %p91 = por %p89, %p90
      %s92 = ssub.s32 %s28, %s35
      %p93 = scmp.eq.s32.totalorder %s92, 0
      %s95 = sadd.s32 %s94, 1
      %s96 = scalar_select %p93, %s94, %s95
      %p99 = pneg %p93
      %p100 = scmp.eq.s32.totalorder %s20, 3
      %p101 = por %p99, %p100
      %p102 = scmp.ne.s32.totalorder %s94, %s97
      %p103 = scmp.eq.s32.totalorder %s20, 0
      %p104 = por %p102, %p103
      %p105 = scmp.ne.s32.totalorder %s94, %s97
      %p106 = scmp.eq.s32.totalorder %s25, 3
      %p107 = por %p105, %p106
      %p108 = scmp.ne.s32.totalorder %s97, %s98
      %p109 = scmp.eq.s32.totalorder %s25, 0
      %p110 = por %p108, %p109
      %p111 = scmp.ne.s32.totalorder %s97, %s98
      %p112 = scmp.eq.s32.totalorder %s26, 3
      %p113 = por %p111, %p112
      %p115 = scmp.ne.s32.totalorder %s98, %s114
      %p116 = scmp.eq.s32.totalorder %s26, 0
      %p117 = por %p115, %p116
      %s118 = ssub.s32 %s28, %s35
      %p119 = scmp.eq.s32.totalorder %s118, 0
      %s121 = sadd.s32 %s120, 1
      %s122 = scalar_select %p119, %s120, %s121
      %p125 = pneg %p119
      %p126 = scmp.eq.s32.totalorder %s20, 3
      %p127 = por %p125, %p126
      %p128 = scmp.ne.s32.totalorder %s120, %s123
      %p129 = scmp.eq.s32.totalorder %s20, 0
      %p130 = por %p128, %p129
      %p131 = scmp.ne.s32.totalorder %s120, %s123
      %p132 = scmp.eq.s32.totalorder %s25, 3
      %p133 = por %p131, %p132
      %p134 = scmp.ne.s32.totalorder %s123, %s124
      %p135 = scmp.eq.s32.totalorder %s25, 0
      %p136 = por %p134, %p135
      %p137 = scmp.ne.s32.totalorder %s123, %s124
      %p138 = scmp.eq.s32.totalorder %s26, 3
      %p139 = por %p137, %p138
      %p141 = scmp.ne.s32.totalorder %s124, %s140
      %p142 = scmp.eq.s32.totalorder %s26, 0
      %p143 = por %p141, %p142
      %s145 = sadd.s32 %s144, 1
      %p148 = scmp.eq.s32.totalorder %s20, 3
      %p149 = scmp.ne.s32.totalorder %s144, %s146
      %p150 = scmp.eq.s32.totalorder %s20, 0
      %p151 = por %p149, %p150
      %p152 = scmp.ne.s32.totalorder %s144, %s146
      %p153 = scmp.eq.s32.totalorder %s25, 3
      %p154 = por %p152, %p153
      %p155 = scmp.ne.s32.totalorder %s146, %s147
      %p156 = scmp.eq.s32.totalorder %s25, 0
      %p157 = por %p155, %p156
      %p158 = scmp.ne.s32.totalorder %s146, %s147
      %p159 = scmp.eq.s32.totalorder %s26, 3
      %p160 = por %p158, %p159
      %p162 = scmp.ne.s32.totalorder %s147, %s161
      %p163 = scmp.eq.s32.totalorder %s26, 0
      %p164 = por %p162, %p163
      %s165 = ssub.s32 %s27, %s39
      %p166 = scmp.eq.s32.totalorder %s165, 0
      %s168 = sadd.s32 %s167, 1
      %s169 = scalar_select %p166, %s167, %s168
      %p172 = pneg %p166
      %p173 = scmp.eq.s32.totalorder %s20, 3
      %p174 = por %p172, %p173
      %p175 = scmp.ne.s32.totalorder %s167, %s170
      %p176 = scmp.eq.s32.totalorder %s20, 0
      %p177 = por %p175, %p176
      %p178 = scmp.ne.s32.totalorder %s167, %s170
      %p179 = scmp.eq.s32.totalorder %s25, 3
      %p180 = por %p178, %p179
      %p181 = scmp.ne.s32.totalorder %s170, %s171
      %p182 = scmp.eq.s32.totalorder %s25, 0
      %p183 = por %p181, %p182
      %p184 = scmp.ne.s32.totalorder %s170, %s171
      %p185 = scmp.eq.s32.totalorder %s26, 3
      %p186 = por %p184, %p185
      %p188 = scmp.ne.s32.totalorder %s171, %s187
      %p189 = scmp.eq.s32.totalorder %s26, 0
      %p190 = por %p188, %p189
      %p191 = scmp.le.s32.totalorder 1, %s20
      %p192 = scmp.lt.s32.totalorder %s20, 5
      %p193 = pnand %p191, %p192
      %p194 = pneg %p193
      // Predicated region
      $region9: #{tpu_custom_call.1} parent=5 // pred_check
        _
      $region10: #{tpu_custom_call.1} parent=5 // pred_check_branch
        %196 = sbr.rel (%p193) target = $region12
      $region11: #{tpu_custom_call.1} parent=5 // pred_region
        %s197 = ssub.s32 %s20, 1
        // Predicated region
        $region13: #{tpu_custom_call.1} parent=11 // pred_check
          %p198 = pneg %p157
        $region14: #{tpu_custom_call.1} parent=11 // pred_check_branch
          %200 = sbr.rel (%p198) target = $region16
        $region15: #{tpu_custom_call.1} parent=11 // pred_region
          _
        $region16: #{tpu_custom_call.1} parent=11 // pred_fallthru
          _
      $region12: #{tpu_custom_call.1} parent=5 // pred_fallthru
        _
      %p201 = scmp.lt.s32.totalorder %s20, 4
      // Predicated region
      $region17: #{tpu_custom_call.1} parent=5 // pred_check
        %p202 = pneg %p201
      $region18: #{tpu_custom_call.1} parent=5 // pred_check_branch
        %204 = sbr.rel (%p202) target = $region20
      $region19: #{tpu_custom_call.1} parent=5 // pred_region
        // Predicated region
        $region21: #{tpu_custom_call.1} parent=19 // pred_check
          %p205 = pneg %p52
        $region22: #{tpu_custom_call.1} parent=19 // pred_check_branch
          %207 = sbr.rel (%p205) target = $region24
        $region23: #{tpu_custom_call.1} parent=19 // pred_region
          %s208 = sand.u32 %s42, 1
          %s209 = scalar_lea.sflag [#allocation3], %s208
          %s210 = sand.u32 %s42, 1
          %s211 = smul.addr %s210, 16
          %s212 = scalar_lea.vmem [#allocation2], %s211
          %s213 = smul.u32 2, %s27
          %s214 = ssub.s32 3, %s213
          %p215 = scmp.lt.s32.totalorder %s214, 2
          %s216 = scalar_select %p215, %s214, 2
          %s217 = smul.u32 128, %s216
          %s219 = ssub.s32 256, %s217
          %220 = vsyncadd %s209, %s219
          %p221 = scmp.ne.s32.totalorder 0, %s217
          %s222 = smul.addr %s213, 128
          %s223 = scalar_lea.hbm %s0, %s222
          %s224 = smul.u32 8, %s216
          %s225 = sshll.u32 %s212, 4
          %s226 = int_to_ptr.vmem [resolvable:$true] %s225
          %s227 = sshll.u32 %s224, 4
          %231 = dma.hbm_to_vmem [thread:$0]  (%p221), %s223, %s227, %s226, %s209, 128, 128, 8
        $region24: #{tpu_custom_call.1} parent=19 // pred_fallthru
          _
        // Predicated region
        $region25: #{tpu_custom_call.1} parent=19 // pred_check
          %p232 = pneg %p78
        $region26: #{tpu_custom_call.1} parent=19 // pred_check_branch
          %234 = sbr.rel (%p232) target = $region28
        $region27: #{tpu_custom_call.1} parent=19 // pred_region
          %s235 = sand.u32 %s20, 1
          %s236 = scalar_lea.sflag [#allocation6], %s235
          %s237 = sand.u32 %s68, 1
          %s238 = smul.addr %s237, 128
          %s239 = scalar_lea.vmem [#allocation5], %s238
          %s241 = ssub.s32 2048, 2048
          %242 = vsyncadd %s236, %s241
          %s243 = smul.addr %s28, 128
          %s244 = scalar_lea.hbm %s1, %s243
          %s245 = sshll.u32 %s239, 4
          %s246 = int_to_ptr.vmem [resolvable:$true] %s245
          %251 = dma.hbm_to_vmem [thread:$0]  %s244, 2048, %s246, %s236, 256, 128, 8
        $region28: #{tpu_custom_call.1} parent=19 // pred_fallthru
          _
        // Predicated region
        $region29: #{tpu_custom_call.1} parent=19 // pred_check
          %p252 = pneg %p104
        $region30: #{tpu_custom_call.1} parent=19 // pred_check_branch
          %254 = sbr.rel (%p252) target = $region32
        $region31: #{tpu_custom_call.1} parent=19 // pred_region
          %p255 = scmp.lt.s32.totalorder %s28, 1
          %s256 = scalar_select %p255, %s28, 1
          %s257 = scalar_lea.vmem %s2, %s256
        $region32: #{tpu_custom_call.1} parent=19 // pred_fallthru
          _
        // Predicated region
        $region33: #{tpu_custom_call.1} parent=19 // pred_check
          %p258 = pneg %p130
        $region34: #{tpu_custom_call.1} parent=19 // pred_check_branch
          %260 = sbr.rel (%p258) target = $region36
        $region35: #{tpu_custom_call.1} parent=19 // pred_region
          %s261 = sand.u32 %s20, 1
          %s262 = scalar_lea.sflag [#allocation6], %s261
          %s263 = sand.u32 %s120, 1
          %s264 = smul.addr %s263, 128
          %s265 = scalar_lea.vmem [#allocation7], %s264
          %s266 = smul.u32 16, %s28
          %s268 = ssub.s32 2048, 2048
          %269 = vsyncadd %s262, %s268
          %s270 = smul.addr %s266, 128
          %s271 = scalar_lea.hbm %s3, %s270
          %s272 = sshll.u32 %s265, 4
          %s273 = int_to_ptr.vmem [resolvable:$true] %s272
          %278 = dma.hbm_to_vmem [thread:$0]  %s271, 2048, %s273, %s262, 128, 128, 8
        $region36: #{tpu_custom_call.1} parent=19 // pred_fallthru
          _
      $region20: #{tpu_custom_call.1} parent=5 // pred_fallthru
        _
      %p279 = scmp.le.s32.totalorder 1, %s20
      %p280 = scmp.lt.s32.totalorder %s20, 5
      %p281 = pnand %p279, %p280
      %p282 = pneg %p281
      // Predicated region
      $region37: #{tpu_custom_call.1} parent=5 // pred_check
        _
      $region38: #{tpu_custom_call.1} parent=5 // pred_check_branch
        %284 = sbr.rel (%p281) target = $region40
      $region39: #{tpu_custom_call.1} parent=5 // pred_region
        %s285 = ssub.s32 %s20, 1
        %s286 = sand.u32 %s45, 1
        %s287 = scalar_lea.sflag [#allocation3], %s286
        %s288 = sand.u32 %s45, 1
        %s289 = smul.addr %s288, 16
        %s290 = scalar_lea.vmem [#allocation2], %s289
        // Predicated region
        $region41: #{tpu_custom_call.1} parent=39 // pred_check
          %p291 = pneg %p58
        $region42: #{tpu_custom_call.1} parent=39 // pred_check_branch
          %293 = sbr.rel (%p291) target = $region44
        $region43: #{tpu_custom_call.1} parent=39 // pred_region
          %294 = dma.done %s287, 256
        $region44: #{tpu_custom_call.1} parent=39 // pred_fallthru
          _
        %s295 = sand.u32 %s25, 1
        %s296 = scalar_lea.sflag [#allocation6], %s295
        %s297 = sand.u32 %s71, 1
        %s298 = smul.addr %s297, 128
        %s299 = scalar_lea.vmem [#allocation5], %s298
        // Predicated region
        $region45: #{tpu_custom_call.1} parent=39 // pred_check
          %p300 = pneg %p84
        $region46: #{tpu_custom_call.1} parent=39 // pred_check_branch
          %302 = sbr.rel (%p300) target = $region48
        $region47: #{tpu_custom_call.1} parent=39 // pred_region
          %303 = dma.done %s296, 2048
        $region48: #{tpu_custom_call.1} parent=39 // pred_fallthru
          _
        %s304 = sand.u32 %s25, 1
        %s305 = scalar_lea.sflag [#allocation6], %s304
        %s306 = sand.u32 %s123, 1
        %s307 = smul.addr %s306, 128
        %s308 = scalar_lea.vmem [#allocation7], %s307
        // Predicated region
        $region49: #{tpu_custom_call.1} parent=39 // pred_check
          %p309 = pneg %p136
        $region50: #{tpu_custom_call.1} parent=39 // pred_check_branch
          %311 = sbr.rel (%p309) target = $region52
        $region51: #{tpu_custom_call.1} parent=39 // pred_region
          %312 = dma.done %s305, 2048
        $region52: #{tpu_custom_call.1} parent=39 // pred_fallthru
          _
        %s313 = sand.u32 %s45, 1
        %s314 = scalar_lea.sflag [#allocation3], %s313
        %s315 = sand.u32 %s45, 1
        %s316 = smul.addr %s315, 16
        %s317 = scalar_lea.vmem [#allocation2], %s316
        %p318 = pneg %p58
        %p319 = pneg %p55
        %s320 = sand.u32 %s25, 1
        %s321 = scalar_lea.sflag [#allocation6], %s320
        %s322 = sand.u32 %s71, 1
        %s323 = smul.addr %s322, 128
        %s324 = scalar_lea.vmem [#allocation5], %s323
        %p325 = pneg %p84
        %p326 = pneg %p81
        %p327 = scmp.lt.s32.totalorder %s30, 1
        %s328 = scalar_select %p327, %s30, 1
        %s329 = scalar_lea.vmem %s2, %s328
        %p330 = pneg %p110
        %p331 = pneg %p107
        %s332 = sand.u32 %s25, 1
        %s333 = scalar_lea.sflag [#allocation6], %s332
        %s334 = sand.u32 %s123, 1
        %s335 = smul.addr %s334, 128
        %s336 = scalar_lea.vmem [#allocation7], %s335
        %p337 = pneg %p136
        %p338 = pneg %p133
        %p339 = pneg %p157
        %p340 = pneg %p154
        %p341 = pneg %p183
        %p342 = pneg %p180
        %s343 = sand.u32 %s170, 1
        %s344 = scalar_lea.sflag [#allocation4], %s343
        %s345 = sand.u32 %s170, 1
        %s346 = smul.addr %s345, 16
        %s347 = scalar_lea.vmem [#allocation8], %s346
        %s348 = smul.u32 2, %s29
        %s349 = ssub.s32 3, %s348
        %p350 = scmp.lt.s32.totalorder %s349, 2
        %s351 = scalar_select %p350, %s349, 2
        %s352 = smul.u32 128, %s351
        %p353 = scmp.lt.s32.totalorder %s30, 1
        %s354 = scalar_select %p353, %s30, 1
        %s355 = scalar_lea.vmem %s2, %s354
        %s356 = smul.u32 16, %s30
        %s357 = smul.u32 2, %s29
        %s358 = ssub.s32 3, %s357
        %p359 = scmp.lt.s32.totalorder %s358, 2
        %s360 = scalar_select %p359, %s358, 2
        %s361 = smul.u32 128, %s360
        %p362 = scmp.eq.s32.totalorder %s30, 0
        // Predicated region
        $region53: #{tpu_custom_call.1} parent=39 // pred_check
          %p363 = pneg %p362
        $region54: #{tpu_custom_call.1} parent=39 // pred_check_branch
          %365 = sbr.rel (%p363) target = $region56
        $region55: #{tpu_custom_call.1} parent=39 // pred_region
          %366 = vst [vmem:[%s347] sm:$0xff] 0.0
          %367 = vst [vmem:[%s347 + $0x8] sm:$0xff] 0.0
        $region56: #{tpu_custom_call.1} parent=39 // pred_fallthru
          _
        %v368 = vld [vmem:[%s290] sm:$0xff]
        %v369 = vld [vmem:[%s290 + $0x8] sm:$0xff]
        %v370 = vld [vmem:[%s299] sm:$0xff]
        %v371 = vld [vmem:[%s299 + $0x8] sm:$0xff]
        %v372 = vld [vmem:[%s299 + $0x10] sm:$0xff]
        %v373 = vld [vmem:[%s299 + $0x18] sm:$0xff]
        %v374 = vld [vmem:[%s299 + $0x20] sm:$0xff]
        %v375 = vld [vmem:[%s299 + $0x28] sm:$0xff]
        %v376 = vld [vmem:[%s299 + $0x30] sm:$0xff]
        %v377 = vld [vmem:[%s299 + $0x38] sm:$0xff]
        %v378 = vld [vmem:[%s299 + $0x40] sm:$0xff]
        %v379 = vld [vmem:[%s299 + $0x48] sm:$0xff]
        %v380 = vld [vmem:[%s299 + $0x50] sm:$0xff]
        %v381 = vld [vmem:[%s299 + $0x58] sm:$0xff]
        %v382 = vld [vmem:[%s299 + $0x60] sm:$0xff]
        %v383 = vld [vmem:[%s299 + $0x68] sm:$0xff]
        %v384 = vld [vmem:[%s299 + $0x70] sm:$0xff]
        %v385 = vld [vmem:[%s299 + $0x78] sm:$0xff]
        %v386 = vld [vmem:[%s355] sm:$0x1]
        %v388 = vlaneseq
        %v389 = vshrl.u32 %v388, 7
        %v390 = vsub.s32 0, %v389
        %v391 = vrot.slane %v386, %v390
        %393 = vmatprep.subr.mxu0 0.0
        %394 = vmatpush1.msra.mxu0 %v370
        %395 = vmatprep.subr.mxu0 0.0
        %396 = vmatpush1.msra.mxu0 %v371
        %397 = vmatprep.subr.mxu0 0.0
        %398 = vmatpush1.msra.mxu0 %v372
        %399 = vmatprep.subr.mxu0 0.0
        %400 = vmatpush1.msra.mxu0 %v373
        %401 = vmatprep.subr.mxu0 0.0
        %402 = vmatpush1.msra.mxu0 %v374
        %403 = vmatprep.subr.mxu0 0.0
        %404 = vmatpush1.msra.mxu0 %v375
        %405 = vmatprep.subr.mxu0 0.0
        %406 = vmatpush1.msra.mxu0 %v376
        %407 = vmatprep.subr.mxu0 0.0
        %408 = vmatpush1.msra.mxu0 %v377
        %409 = vmatprep.subr.mxu0 0.0
        %410 = vmatpush1.msra.mxu0 %v378
        %411 = vmatprep.subr.mxu0 0.0
        %412 = vmatpush1.msra.mxu0 %v379
        %413 = vmatprep.subr.mxu0 0.0
        %414 = vmatpush1.msra.mxu0 %v380
        %415 = vmatprep.subr.mxu0 0.0
        %416 = vmatpush1.msra.mxu0 %v381
        %417 = vmatprep.subr.mxu0 0.0
        %418 = vmatpush1.msra.mxu0 %v382
        %419 = vmatprep.subr.mxu0 0.0
        %420 = vmatpush1.msra.mxu0 %v383
        %421 = vmatprep.subr.mxu0 0.0
        %422 = vmatpush1.msra.mxu0 %v384
        %423 = vmatprep.subr.mxu0 0.0
        %424 = vmatpush1.msra.mxu0 %v385
        %425 = vmatprep.subr.mxu0 0.0
        %426 = vmatpush1.msra.mxu0 0.0
        %427 = vmatprep.subr.mxu0 0.0
        %428 = vmatpush1.msra.mxu0 0.0
        %429 = vmatprep.subr.mxu0 0.0
        %430 = vmatpush1.msra.mxu0 0.0
        %431 = vmatprep.subr.mxu0 0.0
        %432 = vmatpush1.msra.mxu0 0.0
        %433 = vmatprep.subr.mxu0 0.0
        %434 = vmatpush1.msra.mxu0 0.0
        %435 = vmatprep.subr.mxu0 0.0
        %436 = vmatpush1.msra.mxu0 0.0
        %437 = vmatprep.subr.mxu0 0.0
        %438 = vmatpush1.msra.mxu0 0.0
        %439 = vmatprep.subr.mxu0 0.0
        %440 = vmatpush1.msra.mxu0 0.0
        %441 = vmatprep.subr.mxu0 0.0
        %442 = vmatpush1.msra.mxu0 0.0
        %443 = vmatprep.subr.mxu0 0.0
        %444 = vmatpush1.msra.mxu0 0.0
        %445 = vmatprep.subr.mxu0 0.0
        %446 = vmatpush1.msra.mxu0 0.0
        %447 = vmatprep.subr.mxu0 0.0
        %448 = vmatpush1.msra.mxu0 0.0
        %449 = vmatprep.subr.mxu0 0.0
        %450 = vmatpush1.msra.mxu0 0.0
        %451 = vmatprep.subr.mxu0 0.0
        %452 = vmatpush1.msra.mxu0 0.0
        %453 = vmatprep.subr.mxu0 0.0
        %454 = vmatpush1.msra.mxu0 0.0
        %455 = vmatprep.subr.mxu0 0.0
        %456 = vmatpush1.msra.mxu0 0.0
        %457 = vmatprep.mubr.f32.mxu0 0.0
        %458 = vmatmul.mubr.f32.gmra.mrb[0].mxu0 %v368
        %v459 = vpop.f32.mrb[0].mxu0
        %v460 = vadd.f32 %v391, %v459
        %v461 = vpop.f32.mrb[0].mxu0
        %462 = vmatprep.mubr.f32.mxu0 0.0
        %463 = vmatmul.mubr.f32.gmra.mrb[0].mxu0 %v369
        %v464 = vpop.f32.mrb[0].mxu0
        %v465 = vadd.f32 %v391, %v464
        %v466 = vpop.f32.mrb[0].mxu0
        %467 = vdwg.mxu0
        %v468 = vmax.f32 %v460, 0.0
        %v469 = vmax.f32 %v465, 0.0
        %v470 = vld [vmem:[%s347] sm:$0xff]
        %v471 = vld [vmem:[%s347 + $0x8] sm:$0xff]
        %v472 = vld [vmem:[%s308] sm:$0xff]
        %v473 = vld [vmem:[%s308 + $0x8] sm:$0xff]
        %v474 = vld [vmem:[%s308 + $0x10] sm:$0xff]
        %v475 = vld [vmem:[%s308 + $0x18] sm:$0xff]
        %v476 = vld [vmem:[%s308 + $0x20] sm:$0xff]
        %v477 = vld [vmem:[%s308 + $0x28] sm:$0xff]
        %v478 = vld [vmem:[%s308 + $0x30] sm:$0xff]
        %v479 = vld [vmem:[%s308 + $0x38] sm:$0xff]
        %v480 = vld [vmem:[%s308 + $0x40] sm:$0xff]
        %v481 = vld [vmem:[%s308 + $0x48] sm:$0xff]
        %v482 = vld [vmem:[%s308 + $0x50] sm:$0xff]
        %v483 = vld [vmem:[%s308 + $0x58] sm:$0xff]
        %v484 = vld [vmem:[%s308 + $0x60] sm:$0xff]
        %v485 = vld [vmem:[%s308 + $0x68] sm:$0xff]
        %v486 = vld [vmem:[%s308 + $0x70] sm:$0xff]
        %v487 = vld [vmem:[%s308 + $0x78] sm:$0xff]
        %488 = vmatprep.subr.mxu0 0.0
        %489 = vmatpush1.msra.mxu0 %v472
        %490 = vmatprep.subr.mxu0 0.0
        %491 = vmatpush1.msra.mxu0 %v473
        %492 = vmatprep.subr.mxu0 0.0
        %493 = vmatpush1.msra.mxu0 %v474
        %494 = vmatprep.subr.mxu0 0.0
        %495 = vmatpush1.msra.mxu0 %v475
        %496 = vmatprep.subr.mxu0 0.0
        %497 = vmatpush1.msra.mxu0 %v476
        %498 = vmatprep.subr.mxu0 0.0
        %499 = vmatpush1.msra.mxu0 %v477
        %500 = vmatprep.subr.mxu0 0.0
        %501 = vmatpush1.msra.mxu0 %v478
        %502 = vmatprep.subr.mxu0 0.0
        %503 = vmatpush1.msra.mxu0 %v479
        %504 = vmatprep.subr.mxu0 0.0
        %505 = vmatpush1.msra.mxu0 %v480
        %506 = vmatprep.subr.mxu0 0.0
        %507 = vmatpush1.msra.mxu0 %v481
        %508 = vmatprep.subr.mxu0 0.0
        %509 = vmatpush1.msra.mxu0 %v482
        %510 = vmatprep.subr.mxu0 0.0
        %511 = vmatpush1.msra.mxu0 %v483
        %512 = vmatprep.subr.mxu0 0.0
        %513 = vmatpush1.msra.mxu0 %v484
        %514 = vmatprep.subr.mxu0 0.0
        %515 = vmatpush1.msra.mxu0 %v485
        %516 = vmatprep.subr.mxu0 0.0
        %517 = vmatpush1.msra.mxu0 %v486
        %518 = vmatprep.subr.mxu0 0.0
        %519 = vmatpush1.msra.mxu0 %v487
        %520 = vmatprep.subr.mxu0 0.0
        %521 = vmatpush1.msra.mxu0 0.0
        %522 = vmatprep.subr.mxu0 0.0
        %523 = vmatpush1.msra.mxu0 0.0
        %524 = vmatprep.subr.mxu0 0.0
        %525 = vmatpush1.msra.mxu0 0.0
        %526 = vmatprep.subr.mxu0 0.0
        %527 = vmatpush1.msra.mxu0 0.0
        %528 = vmatprep.subr.mxu0 0.0
        %529 = vmatpush1.msra.mxu0 0.0
        %530 = vmatprep.subr.mxu0 0.0
        %531 = vmatpush1.msra.mxu0 0.0
        %532 = vmatprep.subr.mxu0 0.0
        %533 = vmatpush1.msra.mxu0 0.0
        %534 = vmatprep.subr.mxu0 0.0
        %535 = vmatpush1.msra.mxu0 0.0
        %536 = vmatprep.subr.mxu0 0.0
        %537 = vmatpush1.msra.mxu0 0.0
        %538 = vmatprep.subr.mxu0 0.0
        %539 = vmatpush1.msra.mxu0 0.0
        %540 = vmatprep.subr.mxu0 0.0
        %541 = vmatpush1.msra.mxu0 0.0
        %542 = vmatprep.subr.mxu0 0.0
        %543 = vmatpush1.msra.mxu0 0.0
        %544 = vmatprep.subr.mxu0 0.0
        %545 = vmatpush1.msra.mxu0 0.0
        %546 = vmatprep.subr.mxu0 0.0
        %547 = vmatpush1.msra.mxu0 0.0
        %548 = vmatprep.subr.mxu0 0.0
        %549 = vmatpush1.msra.mxu0 0.0
        %550 = vmatprep.subr.mxu0 0.0
        %551 = vmatpush1.msra.mxu0 0.0
        %552 = vmatprep.mubr.f32.mxu0 0.0
        %553 = vmatmul.mubr.f32.gmra.mrb[0].mxu0 %v468
        %v554 = vpop.f32.mrb[0].mxu0
        %v555 = vadd.f32 0.0, %v554
        %v556 = vpop.f32.mrb[0].mxu0
        %557 = vmatprep.mubr.f32.mxu0 0.0
        %558 = vmatmul.mubr.f32.gmra.mrb[0].mxu0 %v469
        %v559 = vpop.f32.mrb[0].mxu0
        %v560 = vadd.f32 0.0, %v559
        %v561 = vpop.f32.mrb[0].mxu0
        %562 = vdwg.mxu0
        %v563 = vadd.f32 %v470, %v555
        %v564 = vadd.f32 %v471, %v560
        %565 = vst [vmem:[%s347] sm:$0xff] %v563
        %566 = vst [vmem:[%s347 + $0x8] sm:$0xff] %v564
        %p567 = scmp.eq.s32.totalorder %s30, 1
        // Predicated region
        $region57: #{tpu_custom_call.1} parent=39 // pred_check
          %p568 = pneg %p567
        $region58: #{tpu_custom_call.1} parent=39 // pred_check_branch
          %570 = sbr.rel (%p568) target = $region60
        $region59: #{tpu_custom_call.1} parent=39 // pred_region
          %v571 = vld [vmem:[%s347] sm:$0xff]
          %v572 = vld [vmem:[%s347 + $0x8] sm:$0xff]
          %v573 = vld [vmem:[%s4] sm:$0x1]
          %v575 = vlaneseq
          %v576 = vshrl.u32 %v575, 7
          %v577 = vsub.s32 0, %v576
          %v578 = vrot.slane %v573, %v577
          %v580 = vadd.f32 %v571, %v578
          %v581 = vadd.f32 %v572, %v578
          %582 = vst [vmem:[%s347] sm:$0xff] %v580
          %583 = vst [vmem:[%s347 + $0x8] sm:$0xff] %v581
        $region60: #{tpu_custom_call.1} parent=39 // pred_fallthru
          _
        %s584 = sand.u32 %s170, 1
        %s585 = scalar_lea.sflag [#allocation4], %s584
        %s586 = sand.u32 %s170, 1
        %s587 = smul.addr %s586, 16
        %s588 = scalar_lea.vmem [#allocation8], %s587
        // Predicated region
        $region61: #{tpu_custom_call.1} parent=39 // pred_check
          %p589 = pneg %p180
        $region62: #{tpu_custom_call.1} parent=39 // pred_check_branch
          %591 = sbr.rel (%p589) target = $region64
        $region63: #{tpu_custom_call.1} parent=39 // pred_region
          %s592 = smul.u32 2, %s29
          %s593 = ssub.s32 3, %s592
          %p594 = scmp.lt.s32.totalorder %s593, 2
          %s595 = scalar_select %p594, %s593, 2
          %s596 = smul.u32 128, %s595
          %s598 = ssub.s32 256, %s596
          %599 = vsyncadd %s585, %s598
          %p600 = scmp.ne.s32.totalorder 0, %s596
          %s601 = smul.addr %s592, 128
          %s602 = scalar_lea.hbm %s5, %s601
          %s603 = smul.u32 8, %s595
          %s604 = sshll.u32 %s588, 4
          %s605 = int_to_ptr.vmem [resolvable:$true] %s604
          %s606 = sshll.u32 %s603, 4
          %610 = dma.vmem_to_hbm [thread:$0]  (%p600), %s605, %s606, %s602, %s585, 128, 128, 8
        $region64: #{tpu_custom_call.1} parent=39 // pred_fallthru
          _
      $region40: #{tpu_custom_call.1} parent=5 // pred_fallthru
        _
      %p611 = scmp.le.s32.totalorder 2, %s20
      // Predicated region
      $region65: #{tpu_custom_call.1} parent=5 // pred_check
        %p612 = pneg %p611
      $region66: #{tpu_custom_call.1} parent=5 // pred_check_branch
        %614 = sbr.rel (%p612) target = $region68
      $region67: #{tpu_custom_call.1} parent=5 // pred_region
        %s615 = ssub.s32 %s20, 2
        // Predicated region
        $region69: #{tpu_custom_call.1} parent=67 // pred_check
          %p616 = pneg %p186
        $region70: #{tpu_custom_call.1} parent=67 // pred_check_branch
          %618 = sbr.rel (%p616) target = $region72
        $region71: #{tpu_custom_call.1} parent=67 // pred_region
          %s619 = sand.u32 %s171, 1
          %s620 = scalar_lea.sflag [#allocation4], %s619
          %s621 = sand.u32 %s171, 1
          %s622 = smul.addr %s621, 16
          %s623 = scalar_lea.vmem [#allocation8], %s622
          %624 = dma.done %s620, 256
        $region72: #{tpu_custom_call.1} parent=67 // pred_fallthru
          _
      $region68: #{tpu_custom_call.1} parent=5 // pred_fallthru
        _
    $region6: #{tpu_custom_call.1} parent=1 // loop_footer
      %s24 = sadd.s32 1, %s20
    $region7: #{tpu_custom_call.1} parent=1 // loop_footer_branch
      %19 = sbr.rel target = $region3
    $region8: #{tpu_custom_call.1} parent=1 // loop_exit
      _
    %625 = vsyncpa [#allocation3], 1
    %s626 = scalar_lea.sflag [#allocation3], 1
    %627 = vsyncpa %s626, 1
    %628 = vsyncpa [#allocation6], 1
    %s629 = scalar_lea.sflag [#allocation6], 1
    %630 = vsyncpa %s629, 1
    %631 = vsyncpa [#allocation4], 1
    %s632 = scalar_lea.sflag [#allocation4], 1
    %633 = vsyncpa %s632, 1

</llo_original>
